<compile_context>
chip_gen: v5e
topology: v5e:2x2
jax: 0.10.0
libtpu: 0.0.40
codegen_flags: <defaults>
</compile_context>

<pallas_src>
import functools
import math

import jax
import jax.numpy as jnp
from jax.experimental import pallas as pl
from jax.experimental.pallas import tpu as pltpu


def _round_up(x, m):
    return (x + m - 1) // m * m


def moe_linear_kernel(x_ref, w_ref, bias_ref, cw_ref, o_ref, *, tk):
    # grid = (N_tiles, E, K_tiles); reduction axes (E, K) are the trailing ones.
    e = pl.program_id(1)
    k = pl.program_id(2)

    @pl.when(jnp.logical_and(e == 0, k == 0))
    def _init():
        # Accumulator initialized with the pre-blended bias (cw @ bias), f32.
        o_ref[...] = bias_ref[...]

    scale = cw_ref[0]                                    # [Bp, 1] f32, B on sublanes
    # x is fully resident; slice out the current K chunk (128-aligned start).
    xk = x_ref[:, pl.ds(pl.multiple_of(k * tk, 128), tk)]   # [Bp, tk] bf16
    # [Bp, tk] @ [tk, tn] -> MXU, f32 accumulation, lane-dense output (tn).
    y = jnp.dot(xk, w_ref[0, 0], preferred_element_type=jnp.float32)
    o_ref[...] += scale * y                              # VPU broadcast over lanes


def moe_linear(x, controlweights, weight, bias, *, tn=512, tk=2048,
               compute_dtype=jnp.bfloat16):
    B, in_f = x.shape
    E, out_f, _ = weight.shape

    # Bounded, 128-aligned tiles (capped at the padded layer size). Default 512x2048
    # bf16 weight tile = 2 MiB per buffer -> ~4-5 MiB live VMEM with double buffering,
    # comfortably inside every generation's budget while keeping each per-step DMA
    # well above the grid-step overhead.
    tn = min(_round_up(tn, 128), _round_up(out_f, 128))
    tk = min(_round_up(tk, 128), _round_up(in_f, 128))
    Bp = _round_up(max(B, 1), 16)       # bf16 packs 16 rows / sublane group
    Kp = _round_up(in_f, tk)
    Np = _round_up(out_f, tn)
    n_tiles = Np // tn
    k_tiles = Kp // tk

    # ----- one-time layout prep outside the kernel ------------------------------
    # weight^T, padded, then repacked tile-major: [E, n_tiles, Kp, tn] so each
    # (tk, tn) tile the kernel consumes is one contiguous HBM burst.
    w_t = jnp.transpose(weight, (0, 2, 1)).astype(compute_dtype)       # [E, in_f, out_f]
    w_t = jnp.pad(w_t, ((0, 0), (0, Kp - in_f), (0, Np - out_f)))      # [E, Kp, Np]
    w_tiled = w_t.reshape(E, Kp, n_tiles, tn).transpose(0, 2, 1, 3)    # [E, n_tiles, Kp, tn]

    x_p = jnp.pad(x.astype(compute_dtype), ((0, Bp - B), (0, Kp - in_f)))

    # Blended bias (tiny matmul) done in the wrapper, f32, used as accumulator init.
    b_blend = (controlweights.astype(jnp.float32) @ bias.astype(jnp.float32))
    b_blend = jnp.pad(b_blend, ((0, Bp - B), (0, Np - out_f)))          # [Bp, Np]

    cw_p = jnp.pad(controlweights.astype(jnp.float32), ((0, Bp - B), (0, 0)))
    cw3 = jnp.transpose(cw_p).reshape(E, Bp, 1)                         # B on sublanes

    itemsize = jnp.dtype(compute_dtype).itemsize
    cost = pl.CostEstimate(
        flops=int(2 * Bp * Np * Kp * E),
        transcendentals=0,
        bytes_accessed=int(E * Kp * Np * itemsize      # weights (dominant stream)
                           + Bp * Kp * itemsize        # x (resident, read once)
                           + Bp * Np * 4               # out (f32)
                           + Bp * Np * 4               # blended bias init
                           + E * Bp * 4))              # controlweights

    kernel = functools.partial(moe_linear_kernel, tk=tk)

    out_p = pl.pallas_call(
        kernel,
        out_shape=jax.ShapeDtypeStruct((Bp, Np), jnp.float32),
        grid_spec=pltpu.PrefetchScalarGridSpec(
            num_scalar_prefetch=0,
            grid=(n_tiles, E, k_tiles),                                   # reductions last
            in_specs=[
                pl.BlockSpec((Bp, Kp), lambda j, e, k: (0, 0)),           # x (resident)
                pl.BlockSpec((1, 1, tk, tn), lambda j, e, k: (e, j, k, 0)),  # weight tile
                pl.BlockSpec((Bp, tn), lambda j, e, k: (0, j)),           # blended bias
                pl.BlockSpec((1, Bp, 1), lambda j, e, k: (e, 0, 0)),      # cw[:, e]
            ],
            out_specs=pl.BlockSpec((Bp, tn), lambda j, e, k: (0, j)),     # f32 accumulator
        ),
        compiler_params=pltpu.CompilerParams(
            dimension_semantics=("parallel", "arbitrary", "arbitrary"),
            vmem_limit_bytes=48 * 1024 * 1024),
        cost_estimate=cost,
    )(x_p, w_tiled, b_blend, cw3)

    return out_p[:B, :out_f].astype(x.dtype)


if __name__ == "__main__":
    # Small shapes, deliberately non-aligned to exercise padding; the second call
    # forces multi-tile K/N to exercise the tiling + bias-init-once-per-tile path.
    B, in_features, out_features, num_experts = 4, 160, 200, 4

    key = jax.random.PRNGKey(0)
    kx, kc, kw, kb = jax.random.split(key, 4)

    # Deterministic parameter init mirroring the module
    # (kaiming_uniform(a=sqrt(5)) ~ uniform(-1/sqrt(fan_in), 1/sqrt(fan_in))).
    w_bound = 1.0 / math.sqrt(in_features)
    weight = jax.random.uniform(
        kw, (num_experts, out_features, in_features),
        minval=-w_bound, maxval=w_bound, dtype=jnp.float32)
    bias = jax.random.uniform(
        kb, (num_experts, out_features),
        minval=-w_bound, maxval=w_bound, dtype=jnp.float32)

    x = jax.random.normal(kx, (B, in_features), dtype=jnp.float32)
    controlweights = jax.nn.softmax(
        jax.random.normal(kc, (B, num_experts), dtype=jnp.float32), axis=-1)

    # Reference 1: exact PyTorch forward (f32 params).
    w_blend = (controlweights @ weight.reshape(num_experts, -1)).reshape(
        B, out_features, in_features)
    b_blend_ref = controlweights @ bias
    ref_f32 = jnp.einsum('boi,bi->bo', w_blend, x) + b_blend_ref

    # Reference 2: same bf16-rounded operands the kernel consumes, f32 math.
    xb = x.astype(jnp.bfloat16).astype(jnp.float32)
    wb = weight.astype(jnp.bfloat16).astype(jnp.float32)
    y_e = jnp.einsum('bi,eoi->beo', xb, wb) + bias[None, :, :]
    ref_bf16 = jnp.einsum('be,beo->bo', controlweights, y_e)

    # Run with default (large, clamped) tiles and with forced multi-tile K/N.
    for kwargs in ({}, {"tn": 128, "tk": 128}):
        out = moe_linear(x, controlweights, weight, bias, **kwargs)
        out = jax.block_until_ready(out)
        assert out.shape == (B, out_features)
        assert jnp.allclose(out, ref_bf16, atol=1e-3, rtol=1e-3), \
            f"mismatch vs bf16 reference ({kwargs})"
        assert jnp.allclose(out, ref_f32, atol=5e-2, rtol=5e-2), \
            f"mismatch vs f32 reference ({kwargs})"

    print("KERNEL_OK")
</pallas_src>

<mosaic_0001>
module attributes {stable_mosaic.version = 11 : i64} {
  func.func @moe_linear_kernel(%arg0: i32, %arg1: i32, %arg2: i32, %arg3: memref<16x256xbf16, #tpu.memory_space<vmem>>, %arg4: memref<1x1x256x256xbf16, #tpu.memory_space<vmem>>, %arg5: memref<16x256xf32, #tpu.memory_space<vmem>>, %arg6: memref<1x16x1xf32, #tpu.memory_space<vmem>>, %arg7: memref<16x256xf32, #tpu.memory_space<vmem>>) attributes {dimension_semantics = [#tpu.dimension_semantics<parallel>, #tpu.dimension_semantics<arbitrary>, #tpu.dimension_semantics<arbitrary>], iteration_bounds = array<i64: 1, 4, 1>, scalar_prefetch = 0 : i64, scratch_operands = 0 : i64, tpu.core_type = #tpu.core_type<tc>, window_params = [{pipeline_mode = #tpu.pipeline_mode<synchronous>, transform_indices = @transform_0, window_bounds = array<i64: 16, 256>}, {transform_indices = @transform_1, window_bounds = array<i64: 1, 1, 256, 256>}, {transform_indices = @transform_2, window_bounds = array<i64: 16, 256>}, {transform_indices = @transform_3, window_bounds = array<i64: 1, 16, 1>}, {transform_indices = @transform_4, window_bounds = array<i64: 16, 256>}]} {
    %c0_i32 = arith.constant 0 : i32
    %0 = arith.cmpi eq, %arg1, %c0_i32 : i32
    %c0_i32_0 = arith.constant 0 : i32
    %1 = arith.cmpi eq, %arg2, %c0_i32_0 : i32
    %2 = arith.andi %0, %1 : i1
    %3 = arith.extui %2 : i1 to i32
    %c0_i32_1 = arith.constant 0 : i32
    %4 = arith.cmpi ne, %3, %c0_i32_1 : i32
    scf.if %4 {
      %c0_13 = arith.constant 0 : index
      %c0_14 = arith.constant 0 : index
      %19 = vector.load %arg5[%c0_13, %c0_14] : memref<16x256xf32, #tpu.memory_space<vmem>>, vector<16x256xf32>
      %c0_15 = arith.constant 0 : index
      %c0_16 = arith.constant 0 : index
      %20 = vector.load %arg7[%c0_15, %c0_16] : memref<16x256xf32, #tpu.memory_space<vmem>>, vector<16x256xf32>
      tpu.vector_store %arg7[%c0_15, %c0_16], %19 {strides = array<i32>} : memref<16x256xf32, #tpu.memory_space<vmem>>, vector<16x256xf32>,
    } else {
    }
    %c0 = arith.constant 0 : index
    %c0_2 = arith.constant 0 : index
    %c0_3 = arith.constant 0 : index
    %5 = vector.load %arg6[%c0, %c0_2, %c0_3] : memref<1x16x1xf32, #tpu.memory_space<vmem>>, vector<1x16x1xf32>
    %6 = vector.shape_cast %5 : vector<1x16x1xf32> to vector<16x1xf32>
    %c256_i32 = arith.constant 256 : i32
    %7 = arith.muli %arg2, %c256_i32 : i32
    %8 = tpu.assume_multiple %7, 128 : i32
    %c0_4 = arith.constant 0 : index
    %9 = arith.index_cast %8 : i32 to index
    %10 = vector.load %arg3[%c0_4, %9] : memref<16x256xbf16, #tpu.memory_space<vmem>>, vector<16x256xbf16>
    %c0_5 = arith.constant 0 : index
    %c0_6 = arith.constant 0 : index
    %c0_7 = arith.constant 0 : index
    %c0_8 = arith.constant 0 : index
    %11 = vector.load %arg4[%c0_5, %c0_6, %c0_7, %c0_8] : memref<1x1x256x256xbf16, #tpu.memory_space<vmem>>, vector<1x1x256x256xbf16>
    %12 = vector.shape_cast %11 : vector<1x1x256x256xbf16> to vector<256x256xbf16>
    %cst = arith.constant dense<0.000000e+00> : vector<16x256xf32>
    %13 = tpu.matmul %10, %12, %cst {dimension_numbers = #tpu.dot_dimension_numbers<[1], [0], [0], [1], [0, 0, 1, 1], [], []>} : vector<16x256xbf16>, vector<256x256xbf16>, vector<16x256xf32> -> vector<16x256xf32>
    %c0_9 = arith.constant 0 : index
    %c0_10 = arith.constant 0 : index
    %14 = vector.load %arg7[%c0_9, %c0_10] : memref<16x256xf32, #tpu.memory_space<vmem>>, vector<16x256xf32>
    %15 = vector.broadcast %6 : vector<16x1xf32> to vector<16x256xf32>
    %16 = arith.mulf %15, %13 : vector<16x256xf32>
    %17 = arith.addf %14, %16 : vector<16x256xf32>
    %c0_11 = arith.constant 0 : index
    %c0_12 = arith.constant 0 : index
    %18 = vector.load %arg7[%c0_11, %c0_12] : memref<16x256xf32, #tpu.memory_space<vmem>>, vector<16x256xf32>
    tpu.vector_store %arg7[%c0_11, %c0_12], %17 {strides = array<i32>} : memref<16x256xf32, #tpu.memory_space<vmem>>, vector<16x256xf32>,
    return
  }
  func.func @transform_0(%arg0: i32, %arg1: i32, %arg2: i32) -> (i32, i32) {
    %c0_i32 = arith.constant 0 : i32
    %c0_i32_0 = arith.constant 0 : i32
    %c0_i32_1 = arith.constant 0 : i32
    return %c0_i32, %c0_i32_0 : i32, i32
  }
  func.func @transform_1(%arg0: i32, %arg1: i32, %arg2: i32) -> (i32, i32, i32, i32) {
    %c0_i32 = arith.constant 0 : i32
    %c0_i32_0 = arith.constant 0 : i32
    return %arg1, %arg0, %arg2, %c0_i32 : i32, i32, i32, i32
  }
  func.func @transform_2(%arg0: i32, %arg1: i32, %arg2: i32) -> (i32, i32) {
    %c0_i32 = arith.constant 0 : i32
    %c0_i32_0 = arith.constant 0 : i32
    return %c0_i32, %arg0 : i32, i32
  }
  func.func @transform_3(%arg0: i32, %arg1: i32, %arg2: i32) -> (i32, i32, i32) {
    %c0_i32 = arith.constant 0 : i32
    %c0_i32_0 = arith.constant 0 : i32
    %c0_i32_1 = arith.constant 0 : i32
    return %arg1, %c0_i32, %c0_i32_0 : i32, i32, i32
  }
  func.func @transform_4(%arg0: i32, %arg1: i32, %arg2: i32) -> (i32, i32) {
    %c0_i32 = arith.constant 0 : i32
    %c0_i32_0 = arith.constant 0 : i32
    return %c0_i32, %arg0 : i32, i32
  }
}

</mosaic_0001>

<llo_original>
// kernel: tpu_custom_call.1
$region0: #{tpu_custom_call.1}
  #allocation0 [shape = 'u32[]', space=smem, size = 0x4, offset = 0x4, fixed_abs, tag = 'smem constant byte address 0x4 - core index']
  #allocation1 [shape = 'u32[72,128]{1,0:T(1,128)}', space=vmem, size = 0x9000, scoped, tag = 'internal scratch']
  %s0 = inlined_call_operand.vmem [shape: bf16[16,256], index: 0, kind: input, shape index: {}]
  %s1 = inlined_call_operand.hbm [shape: bf16[4,1,256,256], index: 1, kind: input, shape index: {}]
  %s2 = inlined_call_operand.vmem [shape: f32[16,256], index: 2, kind: input, shape index: {}]
  %s3 = inlined_call_operand.vmem [shape: f32[4,16,1], index: 3, kind: input, shape index: {}]
  %s4 = inlined_call_operand.hbm [shape: f32[16,256], index: 4, kind: output, shape index: {}]
  %s5 = sld [smem:[#allocation0]]
  $region57: #{tpu_custom_call.1} parent=0
    _
  %s7 = ssub.s32 1, %s5
  %s8 = scalar_select 0, %s7, %s5
  $region1: #{tpu_custom_call.1} parent=0
    #allocation2 [shape = 'u8[262144]{0}', space=vmem, size = 0x40000, scoped, tag = 'input window, operand 1']
    #allocation3 [shape = 's32[2]{0}', space=sflag, size = 0x8, scoped, tag = 'scoped memory for tpu_custom_call.1']
    #allocation4 [shape = 's32[2]{0}', space=sflag, size = 0x8, scoped, tag = 'scoped memory for tpu_custom_call.1']
    #allocation5 [shape = 'u8[16384]{0}', space=vmem, size = 0x4000, scoped, tag = 'output window, operand 0, single buffered']
    %9 = vsyncpa [#allocation3], 0
    %s10 = scalar_lea.sflag [#allocation3], 1
    %11 = vsyncpa %s10, 0
    %12 = vsyncpa [#allocation4], 0
    loop: start=0, step=1, limit=6
    $region2: #{tpu_custom_call.1} parent=1 // loop_pre_header
      _
    $region3: #{tpu_custom_call.1} parent=1 // loop_header
      %s14 = sphi 0, %s18
      %p15 = scmp.ge.s32.totalorder %s14, 6
      %s21 = sphi 0, %s40
      %s22 = sphi 0, %s36
      %s23 = sphi 0, %s32
      %s24 = sphi 0, %s21
      %s25 = sphi 0, %s22
      %s26 = sphi 0, %s23
      %s27 = sphi 0, %s24
      %s28 = sphi 0, %s25
      %s29 = sphi 0, %s26
      %s41 = sphi 0, %s41
      %s43 = sphi 0, %s41
      %s44 = sphi 0, %s43
      %s58 = sphi 0, %s44
      %s68 = sphi 0, %s70
      %s71 = sphi 0, %s68
      %s72 = sphi 0, %s71
      %s88 = sphi 0, %s72
      %s94 = sphi 0, %s96
      %s97 = sphi 0, %s94
      %s98 = sphi 0, %s97
      %s114 = sphi 0, %s98
      %s120 = sphi 0, %s122
      %s123 = sphi 0, %s120
      %s124 = sphi 0, %s123
      %s140 = sphi 0, %s124
      %s146 = sphi 0, %s148
      %s149 = sphi 0, %s146
      %s150 = sphi 0, %s149
      %s166 = sphi 0, %s150
    $region4: #{tpu_custom_call.1} parent=1 // loop_header_branch
      %17 = sbr.rel (%p15) target = $region8
    $region5: #{tpu_custom_call.1} parent=1 // loop_body
      %s19 = ssub.s32 %s14, 1
      %s20 = ssub.s32 %s14, 2
      %s30 = sadd.s32 1, %s23
      %p31 = scmp.ge.s32.totalorder %s30, 1
      %s32 = scalar_select %p31, 0, %s30
      %s33 = sadd.s32 1, %s22
      %s34 = scalar_select %p31, %s33, %s22
      %p35 = scmp.ge.s32.totalorder %s34, 4
      %s36 = scalar_select %p35, 0, %s34
      %s37 = sadd.s32 1, %s21
      %s38 = scalar_select %p35, %s37, %s21
      %p39 = scmp.ge.s32.totalorder %s38, 1
      %s40 = scalar_select %p39, 0, %s38
      %s42 = sadd.s32 %s41, 1
      %p45 = scmp.eq.s32.totalorder %s14, 3
      %p46 = scmp.ne.s32.totalorder %s41, %s43
      %p47 = scmp.eq.s32.totalorder %s14, 0
      %p48 = por %p46, %p47
      %p49 = scmp.ne.s32.totalorder %s41, %s43
      %p50 = scmp.eq.s32.totalorder %s19, 3
      %p51 = por %p49, %p50
      %p52 = scmp.ne.s32.totalorder %s43, %s44
      %p53 = scmp.eq.s32.totalorder %s19, 0
      %p54 = por %p52, %p53
      %p55 = scmp.ne.s32.totalorder %s43, %s44
      %p56 = scmp.eq.s32.totalorder %s20, 3
      %p57 = por %p55, %p56
      %p59 = scmp.ne.s32.totalorder %s44, %s58
      %p60 = scmp.eq.s32.totalorder %s20, 0
      %p61 = por %p59, %p60
      %s62 = ssub.s32 %s22, %s36
      %s63 = ssub.s32 %s21, %s40
      %s64 = sor.u32 %s62, %s63
      %s65 = ssub.s32 %s23, %s32
      %s66 = sor.u32 %s64, %s65
      %p67 = scmp.eq.s32.totalorder %s66, 0
      %s69 = sadd.s32 %s68, 1
      %s70 = scalar_select %p67, %s68, %s69
      %p73 = pneg %p67
      %p74 = scmp.eq.s32.totalorder %s14, 3
      %p75 = por %p73, %p74
      %p76 = scmp.ne.s32.totalorder %s68, %s71
      %p77 = scmp.eq.s32.totalorder %s14, 0
      %p78 = por %p76, %p77
      %p79 = scmp.ne.s32.totalorder %s68, %s71
      %p80 = scmp.eq.s32.totalorder %s19, 3
      %p81 = por %p79, %p80
      %p82 = scmp.ne.s32.totalorder %s71, %s72
      %p83 = scmp.eq.s32.totalorder %s19, 0
      %p84 = por %p82, %p83
      %p85 = scmp.ne.s32.totalorder %s71, %s72
      %p86 = scmp.eq.s32.totalorder %s20, 3
      %p87 = por %p85, %p86
      %p89 = scmp.ne.s32.totalorder %s72, %s88
      %p90 = scmp.eq.s32.totalorder %s20, 0
      %p91 = por %p89, %p90
      %s92 = ssub.s32 %s21, %s40
      %p93 = scmp.eq.s32.totalorder %s92, 0
      %s95 = sadd.s32 %s94, 1
      %s96 = scalar_select %p93, %s94, %s95
      %p99 = pneg %p93
      %p100 = scmp.eq.s32.totalorder %s14, 3
      %p101 = por %p99, %p100
      %p102 = scmp.ne.s32.totalorder %s94, %s97
      %p103 = scmp.eq.s32.totalorder %s14, 0
      %p104 = por %p102, %p103
      %p105 = scmp.ne.s32.totalorder %s94, %s97
      %p106 = scmp.eq.s32.totalorder %s19, 3
      %p107 = por %p105, %p106
      %p108 = scmp.ne.s32.totalorder %s97, %s98
      %p109 = scmp.eq.s32.totalorder %s19, 0
      %p110 = por %p108, %p109
      %p111 = scmp.ne.s32.totalorder %s97, %s98
      %p112 = scmp.eq.s32.totalorder %s20, 3
      %p113 = por %p111, %p112
      %p115 = scmp.ne.s32.totalorder %s98, %s114
      %p116 = scmp.eq.s32.totalorder %s20, 0
      %p117 = por %p115, %p116
      %s118 = ssub.s32 %s22, %s36
      %p119 = scmp.eq.s32.totalorder %s118, 0
      %s121 = sadd.s32 %s120, 1
      %s122 = scalar_select %p119, %s120, %s121
      %p125 = pneg %p119
      %p126 = scmp.eq.s32.totalorder %s14, 3
      %p127 = por %p125, %p126
      %p128 = scmp.ne.s32.totalorder %s120, %s123
      %p129 = scmp.eq.s32.totalorder %s14, 0
      %p130 = por %p128, %p129
      %p131 = scmp.ne.s32.totalorder %s120, %s123
      %p132 = scmp.eq.s32.totalorder %s19, 3
      %p133 = por %p131, %p132
      %p134 = scmp.ne.s32.totalorder %s123, %s124
      %p135 = scmp.eq.s32.totalorder %s19, 0
      %p136 = por %p134, %p135
      %p137 = scmp.ne.s32.totalorder %s123, %s124
      %p138 = scmp.eq.s32.totalorder %s20, 3
      %p139 = por %p137, %p138
      %p141 = scmp.ne.s32.totalorder %s124, %s140
      %p142 = scmp.eq.s32.totalorder %s20, 0
      %p143 = por %p141, %p142
      %s144 = ssub.s32 %s21, %s40
      %p145 = scmp.eq.s32.totalorder %s144, 0
      %s147 = sadd.s32 %s146, 1
      %s148 = scalar_select %p145, %s146, %s147
      %p151 = pneg %p145
      %p152 = scmp.eq.s32.totalorder %s14, 3
      %p153 = por %p151, %p152
      %p154 = scmp.ne.s32.totalorder %s146, %s149
      %p155 = scmp.eq.s32.totalorder %s14, 0
      %p156 = por %p154, %p155
      %p157 = scmp.ne.s32.totalorder %s146, %s149
      %p158 = scmp.eq.s32.totalorder %s19, 3
      %p159 = por %p157, %p158
      %p160 = scmp.ne.s32.totalorder %s149, %s150
      %p161 = scmp.eq.s32.totalorder %s19, 0
      %p162 = por %p160, %p161
      %p163 = scmp.ne.s32.totalorder %s149, %s150
      %p164 = scmp.eq.s32.totalorder %s20, 3
      %p165 = por %p163, %p164
      %p167 = scmp.ne.s32.totalorder %s150, %s166
      %p168 = scmp.eq.s32.totalorder %s20, 0
      %p169 = por %p167, %p168
      %p170 = scmp.le.s32.totalorder 1, %s14
      %p171 = scmp.lt.s32.totalorder %s14, 5
      %p172 = pnand %p170, %p171
      %p173 = pneg %p172
      // Predicated region
      $region9: #{tpu_custom_call.1} parent=5 // pred_check
        _
      $region10: #{tpu_custom_call.1} parent=5 // pred_check_branch
        %175 = sbr.rel (%p172) target = $region12
      $region11: #{tpu_custom_call.1} parent=5 // pred_region
        %s176 = ssub.s32 %s14, 1
        // Predicated region
        $region13: #{tpu_custom_call.1} parent=11 // pred_check
          %p177 = pneg %p54
        $region14: #{tpu_custom_call.1} parent=11 // pred_check_branch
          %179 = sbr.rel (%p177) target = $region16
        $region15: #{tpu_custom_call.1} parent=11 // pred_region
          _
        $region16: #{tpu_custom_call.1} parent=11 // pred_fallthru
          _
        // Predicated region
        $region17: #{tpu_custom_call.1} parent=11 // pred_check
          %p180 = pneg %p110
        $region18: #{tpu_custom_call.1} parent=11 // pred_check_branch
          %182 = sbr.rel (%p180) target = $region20
        $region19: #{tpu_custom_call.1} parent=11 // pred_region
          %s183 = smul.u32 2, %s24
          %p184 = scmp.lt.s32.totalorder %s183, 1
          %s185 = scalar_select %p184, %s183, 1
          %s186 = smul.addr %s185, 8
          %s187 = scalar_lea.vmem %s2, %s186
          %s188 = smul.u32 2, %s24
        $region20: #{tpu_custom_call.1} parent=11 // pred_fallthru
          _
      $region12: #{tpu_custom_call.1} parent=5 // pred_fallthru
        _
      %p189 = scmp.lt.s32.totalorder %s14, 4
      // Predicated region
      $region21: #{tpu_custom_call.1} parent=5 // pred_check
        %p190 = pneg %p189
      $region22: #{tpu_custom_call.1} parent=5 // pred_check_branch
        %192 = sbr.rel (%p190) target = $region24
      $region23: #{tpu_custom_call.1} parent=5 // pred_region
        // Predicated region
        $region25: #{tpu_custom_call.1} parent=23 // pred_check
          %p193 = pneg %p78
        $region26: #{tpu_custom_call.1} parent=23 // pred_check_branch
          %195 = sbr.rel (%p193) target = $region28
        $region27: #{tpu_custom_call.1} parent=23 // pred_region
          %s196 = sand.u32 %s68, 1
          %s197 = scalar_lea.sflag [#allocation3], %s196
          %s198 = sand.u32 %s68, 1
          %s199 = smul.addr %s198, 256
          %s200 = scalar_lea.vmem [#allocation2], %s199
          %s201 = smul.u32 32, %s23
          %203 = vsyncadd %s197, 0
          %s204 = smul.addr %s201, 2
          %s205 = smul.addr %s21, 64
          %s206 = sadd.s32 %s204, %s205
          %s207 = smul.addr %s22, 64
          %s208 = sadd.s32 %s206, %s207
          %s209 = smul.addr %s208, 4
          %s210 = scalar_lea.hbm %s1, %s209
          %s211 = sshll.u32 %s210, 4
          %s212 = int_to_ptr.hbm [resolvable:$true] %s211
          %s213 = sshll.u32 %s200, 4
          %s214 = int_to_ptr.vmem [resolvable:$true] %s213
          %219 = dma.hbm_to_vmem [thread:$0]  %s212, 4096, %s214, %s197, 128, 128, 8
        $region28: #{tpu_custom_call.1} parent=23 // pred_fallthru
          _
        // Predicated region
        $region29: #{tpu_custom_call.1} parent=23 // pred_check
          %p220 = pneg %p130
        $region30: #{tpu_custom_call.1} parent=23 // pred_check_branch
          %222 = sbr.rel (%p220) target = $region32
        $region31: #{tpu_custom_call.1} parent=23 // pred_region
          %p223 = scmp.lt.s32.totalorder %s22, 3
          %s224 = scalar_select %p223, %s22, 3
          %s225 = smul.addr %s224, 2
          %s226 = smul.addr %s225, 8
          %s227 = scalar_lea.vmem %s3, %s226
        $region32: #{tpu_custom_call.1} parent=23 // pred_fallthru
          _
      $region24: #{tpu_custom_call.1} parent=5 // pred_fallthru
        _
      %p228 = scmp.le.s32.totalorder 1, %s14
      %p229 = scmp.lt.s32.totalorder %s14, 5
      %p230 = pnand %p228, %p229
      %p231 = pneg %p230
      // Predicated region
      $region33: #{tpu_custom_call.1} parent=5 // pred_check
        _
      $region34: #{tpu_custom_call.1} parent=5 // pred_check_branch
        %233 = sbr.rel (%p230) target = $region36
      $region35: #{tpu_custom_call.1} parent=5 // pred_region
        %s234 = ssub.s32 %s14, 1
        %s235 = sand.u32 %s71, 1
        %s236 = scalar_lea.sflag [#allocation3], %s235
        %s237 = sand.u32 %s71, 1
        %s238 = smul.addr %s237, 256
        %s239 = scalar_lea.vmem [#allocation2], %s238
        // Predicated region
        $region37: #{tpu_custom_call.1} parent=35 // pred_check
          %p240 = pneg %p84
        $region38: #{tpu_custom_call.1} parent=35 // pred_check_branch
          %242 = sbr.rel (%p240) target = $region40
        $region39: #{tpu_custom_call.1} parent=35 // pred_region
          %244 = dma.done %s236, 4096
        $region40: #{tpu_custom_call.1} parent=35 // pred_fallthru
          _
        %p245 = pneg %p54
        %p246 = pneg %p51
        %s247 = sand.u32 %s71, 1
        %s248 = scalar_lea.sflag [#allocation3], %s247
        %s249 = sand.u32 %s71, 1
        %s250 = smul.addr %s249, 256
        %s251 = scalar_lea.vmem [#allocation2], %s250
        %p252 = pneg %p84
        %p253 = pneg %p81
        %s254 = smul.u32 2, %s24
        %p255 = scmp.lt.s32.totalorder %s254, 1
        %s256 = scalar_select %p255, %s254, 1
        %s257 = smul.addr %s256, 8
        %s258 = scalar_lea.vmem %s2, %s257
        %p259 = pneg %p110
        %p260 = pneg %p107
        %p261 = scmp.lt.s32.totalorder %s25, 3
        %s262 = scalar_select %p261, %s25, 3
        %s263 = smul.addr %s262, 2
        %s264 = smul.addr %s263, 8
        %s265 = scalar_lea.vmem %s3, %s264
        %p266 = pneg %p136
        %p267 = pneg %p133
        %p268 = pneg %p162
        %p269 = pneg %p159
        %s270 = smul.u32 32, %s26
        %s271 = smul.u32 2, %s24
        %p272 = scmp.lt.s32.totalorder %s271, 1
        %s273 = scalar_select %p272, %s271, 1
        %s274 = smul.addr %s273, 8
        %s275 = scalar_lea.vmem %s2, %s274
        %s276 = smul.u32 2, %s24
        %p277 = scmp.lt.s32.totalorder %s25, 3
        %s278 = scalar_select %p277, %s25, 3
        %s279 = smul.addr %s278, 2
        %s280 = smul.addr %s279, 8
        %s281 = scalar_lea.vmem %s3, %s280
        %s282 = smul.u32 2, %s24
        %p283 = scmp.eq.s32.totalorder %s25, 0
        %p284 = scmp.eq.s32.totalorder %s26, 0
        %p285 = pnand %p283, %p284
        %p286 = pneg %p285
        // Predicated region
        $region41: #{tpu_custom_call.1} parent=35 // pred_check
          _
        $region42: #{tpu_custom_call.1} parent=35 // pred_check_branch
          %288 = sbr.rel (%p285) target = $region44
        $region43: #{tpu_custom_call.1} parent=35 // pred_region
          %v289 = vld [vmem:[%s275] sm:$0xff]
          %v290 = vld [vmem:[%s275 + $0x8] sm:$0xff]
          %v291 = vld [vmem:[%s275 + $0x10] sm:$0xff]
          %v292 = vld [vmem:[%s275 + $0x18] sm:$0xff]
          %293 = vst [vmem:[#allocation5] sm:$0xff] %v289
          %294 = vst [vmem:[#allocation5 + $0x8] sm:$0xff] %v290
          %295 = vst [vmem:[#allocation5 + $0x10] sm:$0xff] %v291
          %296 = vst [vmem:[#allocation5 + $0x18] sm:$0xff] %v292
        $region44: #{tpu_custom_call.1} parent=35 // pred_fallthru
          _
        %v297 = vld [vmem:[%s281] sm:$0xff]
        %v298 = vld [vmem:[%s281 + $0x8] sm:$0xff]
        %s299 = smul.u32 %s26, 256
        %s300 = sshra.s32 %s299, 7
        %s301 = sand.u32 %s299, 127
        %s302 = smul.addr %s300, 4
        %s303 = scalar_lea.vmem %s0, %s302
        %v304 = vld [vmem:[%s303] sm:$0xff]
        %v305 = vld [vmem:[%s303 + $0x8] sm:$0xff]
        %v306 = vld [vmem:[%s239] sm:$0xff]
        %v307 = vld [vmem:[%s239 + $0x8] sm:$0xff]
        %v308 = vld [vmem:[%s239 + $0x10] sm:$0xff]
        %v309 = vld [vmem:[%s239 + $0x18] sm:$0xff]
        %v310 = vld [vmem:[%s239 + $0x20] sm:$0xff]
        %v311 = vld [vmem:[%s239 + $0x28] sm:$0xff]
        %v312 = vld [vmem:[%s239 + $0x30] sm:$0xff]
        %v313 = vld [vmem:[%s239 + $0x38] sm:$0xff]
        %v314 = vld [vmem:[%s239 + $0x40] sm:$0xff]
        %v315 = vld [vmem:[%s239 + $0x48] sm:$0xff]
        %v316 = vld [vmem:[%s239 + $0x50] sm:$0xff]
        %v317 = vld [vmem:[%s239 + $0x58] sm:$0xff]
        %v318 = vld [vmem:[%s239 + $0x60] sm:$0xff]
        %v319 = vld [vmem:[%s239 + $0x68] sm:$0xff]
        %v320 = vld [vmem:[%s239 + $0x70] sm:$0xff]
        %v321 = vld [vmem:[%s239 + $0x78] sm:$0xff]
        %v322 = vld [vmem:[%s239 + $0x80] sm:$0xff]
        %v323 = vld [vmem:[%s239 + $0x88] sm:$0xff]
        %v324 = vld [vmem:[%s239 + $0x90] sm:$0xff]
        %v325 = vld [vmem:[%s239 + $0x98] sm:$0xff]
        %v326 = vld [vmem:[%s239 + $0xa0] sm:$0xff]
        %v327 = vld [vmem:[%s239 + $0xa8] sm:$0xff]
        %v328 = vld [vmem:[%s239 + $0xb0] sm:$0xff]
        %v329 = vld [vmem:[%s239 + $0xb8] sm:$0xff]
        %v330 = vld [vmem:[%s239 + $0xc0] sm:$0xff]
        %v331 = vld [vmem:[%s239 + $0xc8] sm:$0xff]
        %v332 = vld [vmem:[%s239 + $0xd0] sm:$0xff]
        %v333 = vld [vmem:[%s239 + $0xd8] sm:$0xff]
        %v334 = vld [vmem:[%s239 + $0xe0] sm:$0xff]
        %v335 = vld [vmem:[%s239 + $0xe8] sm:$0xff]
        %v336 = vld [vmem:[%s239 + $0xf0] sm:$0xff]
        %v337 = vld [vmem:[%s239 + $0xf8] sm:$0xff]
        %v340 = vunpack.c.l.b16 %v304
        %v341 = vunpack.c.h.b16 %v304
        %v342 = vunpack.c.l.b16 %v305
        %v343 = vunpack.c.h.b16 %v305
        %v344 = vpack.c.b16 %v342, %v340
        %v345 = vpack.c.b16 %v343, %v341
        %v380 = vunpack.c.l.b16 %v306
        %v381 = vunpack.c.h.b16 %v306
        %v382 = vunpack.c.l.b16 %v307
        %v383 = vunpack.c.h.b16 %v307
        %v384 = vunpack.c.l.b16 %v308
        %v385 = vunpack.c.h.b16 %v308
        %v386 = vunpack.c.l.b16 %v309
        %v387 = vunpack.c.h.b16 %v309
        %v388 = vunpack.c.l.b16 %v310
        %v389 = vunpack.c.h.b16 %v310
        %v390 = vunpack.c.l.b16 %v311
        %v391 = vunpack.c.h.b16 %v311
        %v392 = vunpack.c.l.b16 %v312
        %v393 = vunpack.c.h.b16 %v312
        %v394 = vunpack.c.l.b16 %v313
        %v395 = vunpack.c.h.b16 %v313
        %v396 = vunpack.c.l.b16 %v314
        %v397 = vunpack.c.h.b16 %v314
        %v398 = vunpack.c.l.b16 %v315
        %v399 = vunpack.c.h.b16 %v315
        %v400 = vunpack.c.l.b16 %v316
        %v401 = vunpack.c.h.b16 %v316
        %v402 = vunpack.c.l.b16 %v317
        %v403 = vunpack.c.h.b16 %v317
        %v404 = vunpack.c.l.b16 %v318
        %v405 = vunpack.c.h.b16 %v318
        %v406 = vunpack.c.l.b16 %v319
        %v407 = vunpack.c.h.b16 %v319
        %v408 = vunpack.c.l.b16 %v320
        %v409 = vunpack.c.h.b16 %v320
        %v410 = vunpack.c.l.b16 %v321
        %v411 = vunpack.c.h.b16 %v321
        %v412 = vunpack.c.l.b16 %v322
        %v413 = vunpack.c.h.b16 %v322
        %v414 = vunpack.c.l.b16 %v323
        %v415 = vunpack.c.h.b16 %v323
        %v416 = vunpack.c.l.b16 %v324
        %v417 = vunpack.c.h.b16 %v324
        %v418 = vunpack.c.l.b16 %v325
        %v419 = vunpack.c.h.b16 %v325
        %v420 = vunpack.c.l.b16 %v326
        %v421 = vunpack.c.h.b16 %v326
        %v422 = vunpack.c.l.b16 %v327
        %v423 = vunpack.c.h.b16 %v327
        %v424 = vunpack.c.l.b16 %v328
        %v425 = vunpack.c.h.b16 %v328
        %v426 = vunpack.c.l.b16 %v329
        %v427 = vunpack.c.h.b16 %v329
        %v428 = vunpack.c.l.b16 %v330
        %v429 = vunpack.c.h.b16 %v330
        %v430 = vunpack.c.l.b16 %v331
        %v431 = vunpack.c.h.b16 %v331
        %v432 = vunpack.c.l.b16 %v332
        %v433 = vunpack.c.h.b16 %v332
        %v434 = vunpack.c.l.b16 %v333
        %v435 = vunpack.c.h.b16 %v333
        %v436 = vunpack.c.l.b16 %v334
        %v437 = vunpack.c.h.b16 %v334
        %v438 = vunpack.c.l.b16 %v335
        %v439 = vunpack.c.h.b16 %v335
        %v440 = vunpack.c.l.b16 %v336
        %v441 = vunpack.c.h.b16 %v336
        %v442 = vunpack.c.l.b16 %v337
        %v443 = vunpack.c.h.b16 %v337
        %v444 = vpack.c.b16 %v382, %v380
        %v445 = vpack.c.b16 %v383, %v381
        %v446 = vpack.c.b16 %v386, %v384
        %v447 = vpack.c.b16 %v387, %v385
        %v448 = vpack.c.b16 %v390, %v388
        %v449 = vpack.c.b16 %v391, %v389
        %v450 = vpack.c.b16 %v394, %v392
        %v451 = vpack.c.b16 %v395, %v393
        %v452 = vpack.c.b16 %v398, %v396
        %v453 = vpack.c.b16 %v399, %v397
        %v454 = vpack.c.b16 %v402, %v400
        %v455 = vpack.c.b16 %v403, %v401
        %v456 = vpack.c.b16 %v406, %v404
        %v457 = vpack.c.b16 %v407, %v405
        %v458 = vpack.c.b16 %v410, %v408
        %v459 = vpack.c.b16 %v411, %v409
        %v460 = vpack.c.b16 %v414, %v412
        %v461 = vpack.c.b16 %v415, %v413
        %v462 = vpack.c.b16 %v418, %v416
        %v463 = vpack.c.b16 %v419, %v417
        %v464 = vpack.c.b16 %v422, %v420
        %v465 = vpack.c.b16 %v423, %v421
        %v466 = vpack.c.b16 %v426, %v424
        %v467 = vpack.c.b16 %v427, %v425
        %v468 = vpack.c.b16 %v430, %v428
        %v469 = vpack.c.b16 %v431, %v429
        %v470 = vpack.c.b16 %v434, %v432
        %v471 = vpack.c.b16 %v435, %v433
        %v472 = vpack.c.b16 %v438, %v436
        %v473 = vpack.c.b16 %v439, %v437
        %v474 = vpack.c.b16 %v442, %v440
        %v475 = vpack.c.b16 %v443, %v441
        %508 = vmatpush.bf16.msra.mxu0 %v458
        %509 = vmatpush.bf16.msra.mxu0 %v456
        %510 = vmatpush.bf16.msra.mxu0 %v454
        %511 = vmatpush.bf16.msra.mxu0 %v452
        %512 = vmatpush.bf16.msra.mxu0 %v450
        %513 = vmatpush.bf16.msra.mxu0 %v448
        %514 = vmatpush.bf16.msra.mxu0 %v446
        %515 = vmatpush.bf16.msra.mxu0 %v444
        %516 = vmatmul.bf16.gmra.mxu0 %v344
        %v517 = vpop.f32.mrf.mxu0
        %v518 = vadd.f32 0.0, %v517
        %v519 = vpop.f32.mrf.mxu0
        %v520 = vadd.f32 0.0, %v519
        %521 = vdwg.mxu0
        %522 = vmatpush.bf16.msra.mxu0 %v474
        %523 = vmatpush.bf16.msra.mxu0 %v472
        %524 = vmatpush.bf16.msra.mxu0 %v470
        %525 = vmatpush.bf16.msra.mxu0 %v468
        %526 = vmatpush.bf16.msra.mxu0 %v466
        %527 = vmatpush.bf16.msra.mxu0 %v464
        %528 = vmatpush.bf16.msra.mxu0 %v462
        %529 = vmatpush.bf16.msra.mxu0 %v460
        %530 = vmatmul.bf16.gmra.mxu0 %v345
        %v531 = vpop.f32.mrf.mxu0
        %v532 = vadd.f32 %v518, %v531
        %v533 = vpop.f32.mrf.mxu0
        %v534 = vadd.f32 %v520, %v533
        %535 = vdwg.mxu0
        %536 = vmatpush.bf16.msra.mxu0 %v459
        %537 = vmatpush.bf16.msra.mxu0 %v457
        %538 = vmatpush.bf16.msra.mxu0 %v455
        %539 = vmatpush.bf16.msra.mxu0 %v453
        %540 = vmatpush.bf16.msra.mxu0 %v451
        %541 = vmatpush.bf16.msra.mxu0 %v449
        %542 = vmatpush.bf16.msra.mxu0 %v447
        %543 = vmatpush.bf16.msra.mxu0 %v445
        %544 = vmatmul.bf16.gmra.mxu0 %v344
        %v545 = vpop.f32.mrf.mxu0
        %v546 = vadd.f32 0.0, %v545
        %v547 = vpop.f32.mrf.mxu0
        %v548 = vadd.f32 0.0, %v547
        %549 = vdwg.mxu0
        %550 = vmatpush.bf16.msra.mxu0 %v475
        %551 = vmatpush.bf16.msra.mxu0 %v473
        %552 = vmatpush.bf16.msra.mxu0 %v471
        %553 = vmatpush.bf16.msra.mxu0 %v469
        %554 = vmatpush.bf16.msra.mxu0 %v467
        %555 = vmatpush.bf16.msra.mxu0 %v465
        %556 = vmatpush.bf16.msra.mxu0 %v463
        %557 = vmatpush.bf16.msra.mxu0 %v461
        %558 = vmatmul.bf16.gmra.mxu0 %v345
        %v559 = vpop.f32.mrf.mxu0
        %v560 = vadd.f32 %v546, %v559
        %v561 = vpop.f32.mrf.mxu0
        %v562 = vadd.f32 %v548, %v561
        %563 = vdwg.mxu0
        %v564 = vld [vmem:[#allocation5] sm:$0xff]
        %v565 = vld [vmem:[#allocation5 + $0x8] sm:$0xff]
        %v566 = vld [vmem:[#allocation5 + $0x10] sm:$0xff]
        %v567 = vld [vmem:[#allocation5 + $0x18] sm:$0xff]
        %569 = vset.pattern.permute.xlu0 0
        %570 = vperm.xlu0 %569, %v297
        %v571 = vpop.permute.xlu0 %570
        %574 = vset.pattern.permute.xlu0 0
        %575 = vperm.xlu0 %574, %v298
        %v576 = vpop.permute.xlu0 %575
        %v578 = vmul.f32 %v571, %v532
        %v579 = vmul.f32 %v571, %v560
        %v580 = vmul.f32 %v576, %v534
        %v581 = vmul.f32 %v576, %v562
        %v582 = vadd.f32 %v564, %v578
        %v583 = vadd.f32 %v565, %v579
        %v584 = vadd.f32 %v566, %v580
        %v585 = vadd.f32 %v567, %v581
        %586 = vst [vmem:[#allocation5] sm:$0xff] %v582
        %587 = vst [vmem:[#allocation5 + $0x8] sm:$0xff] %v583
        %588 = vst [vmem:[#allocation5 + $0x10] sm:$0xff] %v584
        %589 = vst [vmem:[#allocation5 + $0x18] sm:$0xff] %v585
        // Predicated region
        $region45: #{tpu_custom_call.1} parent=35 // pred_check
          %p590 = pneg %p159
        $region46: #{tpu_custom_call.1} parent=35 // pred_check_branch
          %592 = sbr.rel (%p590) target = $region48
        $region47: #{tpu_custom_call.1} parent=35 // pred_region
          %s593 = smul.u32 2, %s24
          %595 = vsyncadd [#allocation4], 0
          %s596 = smul.addr %s593, 8
          %s597 = scalar_lea.hbm %s4, %s596
          %s598 = sshll.u32 [#allocation5], 4
          %s599 = int_to_ptr.vmem [resolvable:$true] %s598
          %s600 = sshll.u32 %s597, 4
          %s601 = int_to_ptr.hbm [resolvable:$true] %s600
          %606 = dma.vmem_to_hbm [thread:$0]  %s599, 512, %s601, [#allocation4], 256, 256, 16
        $region48: #{tpu_custom_call.1} parent=35 // pred_fallthru
          _
        // Predicated region
        $region49: #{tpu_custom_call.1} parent=35 // pred_check
          %p607 = pneg %p159
        $region50: #{tpu_custom_call.1} parent=35 // pred_check_branch
          %609 = sbr.rel (%p607) target = $region52
        $region51: #{tpu_custom_call.1} parent=35 // pred_region
          %611 = dma.done [#allocation4], 512
        $region52: #{tpu_custom_call.1} parent=35 // pred_fallthru
          _
      $region36: #{tpu_custom_call.1} parent=5 // pred_fallthru
        _
      %p612 = scmp.le.s32.totalorder 2, %s14
      // Predicated region
      $region53: #{tpu_custom_call.1} parent=5 // pred_check
        %p613 = pneg %p612
      $region54: #{tpu_custom_call.1} parent=5 // pred_check_branch
        %615 = sbr.rel (%p613) target = $region56
      $region55: #{tpu_custom_call.1} parent=5 // pred_region
        %s616 = ssub.s32 %s14, 2
      $region56: #{tpu_custom_call.1} parent=5 // pred_fallthru
        _
    $region6: #{tpu_custom_call.1} parent=1 // loop_footer
      %s18 = sadd.s32 1, %s14
    $region7: #{tpu_custom_call.1} parent=1 // loop_footer_branch
      %13 = sbr.rel target = $region3
    $region8: #{tpu_custom_call.1} parent=1 // loop_exit
      _
    %617 = vsyncpa [#allocation3], 1
    %s618 = scalar_lea.sflag [#allocation3], 1
    %619 = vsyncpa %s618, 1
    %620 = vsyncpa [#allocation4], 1
    %s621 = scalar_lea.sflag [#allocation4], 1
    %622 = vsyncpa %s621, 1

</llo_original>
